<compile_context>
chip_gen: v5e
topology: v5e:2x2
jax: 0.10.0
libtpu: 0.0.40
codegen_flags: <defaults>
</compile_context>

<pallas_src>
import functools

import jax
import jax.numpy as jnp
from jax import lax
from jax.experimental import pallas as pl
from jax.experimental.pallas import tpu as pltpu


def _round_up(x, m):
    return ((x + m - 1) // m) * m


def rnn_recurrence_kernel(tmax_ref,                      # scalar prefetch (SMEM)
                          gates_ref, len_ref,
                          whh1_ref, wih2_ref, whh2_ref, b2_ref,
                          wfc_ref, bfc_ref,
                          out_ref):
    """2-layer LSTM recurrence over precomputed layer-1 input gates.

    tmax_ref:  [n_tiles]   int32, per-tile max sequence length (SMEM)
    gates_ref: [T, B, 4H]  time-major (x_t @ W_ih1 + b1)
    len_ref:   [B, 1]      int32 sequence lengths
    whh1_ref:  [H, 4H]     layer-1 recurrent weights
    wih2_ref:  [H, 4H]     layer-2 input weights
    whh2_ref:  [H, 4H]     layer-2 recurrent weights
    b2_ref:    [1, 4H]
    wfc_ref:   [1, H]      fc weight as a row
    bfc_ref:   [1, 1]
    out_ref:   [B, 1]
    """
    _, B, _ = gates_ref.shape
    H = whh1_ref.shape[0]

    whh1 = whh1_ref[...]
    wih2 = wih2_ref[...]
    whh2 = whh2_ref[...]
    b2 = b2_ref[...]
    lengths = len_ref[...]                               # [B, 1] int32

    # Loop only to this tile's longest valid sequence (data-dependent bound).
    t_stop = tmax_ref[pl.program_id(0)]

    def step(t, carry):
        h1, c1, h2, c2, last_h = carry

        # ---- layer 1: gates = precomputed(x_t) + h1 @ W_hh1
        g1 = gates_ref[t] + jnp.dot(h1, whh1,
                                    preferred_element_type=jnp.float32)
        # Full-width transcendentals (one sigmoid + one tanh over [B, 4H]),
        # gate columns sliced afterwards on the VPU.
        s1 = jax.nn.sigmoid(g1)
        t1 = jnp.tanh(g1)
        i1, f1, o1 = s1[:, 0:H], s1[:, H:2 * H], s1[:, 3 * H:4 * H]
        gg1 = t1[:, 2 * H:3 * H]
        c1n = f1 * c1 + i1 * gg1
        h1n = o1 * jnp.tanh(c1n)

        # ---- layer 2: two dots accumulated into g2 (no per-step concat)
        g2 = (jnp.dot(h1n, wih2, preferred_element_type=jnp.float32)
              + jnp.dot(h2, whh2, preferred_element_type=jnp.float32)
              + b2)
        s2 = jax.nn.sigmoid(g2)
        t2 = jnp.tanh(g2)
        i2, f2, o2 = s2[:, 0:H], s2[:, H:2 * H], s2[:, 3 * H:4 * H]
        gg2 = t2[:, 2 * H:3 * H]
        c2n = f2 * c2 + i2 * gg2
        h2n = o2 * jnp.tanh(c2n)

        # capture layer-2 output at the last valid timestep of each sequence
        is_last = (lengths - 1) == t                     # [B, 1] bool
        last_hn = jnp.where(is_last, h2n, last_h)
        return (h1n, c1n, h2n, c2n, last_hn)

    z = jnp.zeros((B, H), jnp.float32)
    _, _, _, _, last_h = lax.fori_loop(0, t_stop, step, (z, z, z, z, z))

    # fc as a VPU lane reduction (avoids an N=1 MXU matmul on the tail).
    out_ref[...] = (jnp.sum(last_h * wfc_ref[...], axis=-1, keepdims=True)
                    + bfc_ref[...])                      # [B, 1]


def _vmem_limit_bytes():
    """Per-generation VMEM budget (v5e/v6e: 128 MiB phys, v7x: 64 MiB)."""
    try:
        info = pltpu.get_tpu_info()
        cap = int(getattr(info, "vmem_capacity_bytes", 64 * 1024 * 1024))
    except Exception:
        cap = 64 * 1024 * 1024
    return int(min(cap * 3 // 4, 100 * 1024 * 1024))


def rnn_model_forward(matrix, lengths, core_terms, params, *, b_tile=None):
    """matrix: [B, T, 2*query_max_size] f32; lengths: [B] int32;
    core_terms: [B, T] int32. Returns [B, 1] f32 (matches torch forward)."""
    B, T, two_q = matrix.shape
    H = params["whh1"].shape[0]
    G = 4 * H

    # --- layer-1 input projection hoisted out of the recurrence, produced
    # time-major directly (no [B,T,4H] materialize + transpose relayout).
    # wih1 is [2Q+E, 4H]; split so the concatenated x is never materialized.
    # Precision.HIGH (bf16_3x): ~f32-accurate, half the MXU passes of HIGHEST.
    w_m = params["wih1"][:two_q]                              # [2Q, 4H]
    w_e = params["wih1"][two_q:]                              # [E, 4H]
    emb = params["embedding"][core_terms]                     # [B, T, E]
    gates_x = (jnp.einsum("btq,qg->tbg", matrix.astype(jnp.float32), w_m,
                          precision=lax.Precision.HIGH)
               + jnp.einsum("bte,eg->tbg", emb, w_e,
                            precision=lax.Precision.HIGH)
               + params["b1"])                                # [T, B, 4H]

    vmem_limit = _vmem_limit_bytes()

    # --- batch tile sizing: biggest tile the VMEM budget allows (double-
    # buffered gates block dominates), capped at 256 rows, multiple of 8.
    B8 = _round_up(B, 8)
    if b_tile is None:
        gates_bytes_per_row = T * G * 4                       # f32
        weights_bytes = (3 * H * G + G + H + 1) * 4 * 2       # double-buffered
        budget = max(vmem_limit - weights_bytes - (4 << 20), 1 << 20)
        max_rows = max(8, (budget // (2 * gates_bytes_per_row)) // 8 * 8)
        b_tile = int(min(256, max_rows, B8))
        # Keep >= 2 tiles once the batch is big enough so the "parallel" grid
        # axis can feed both TensorCores on v7x (negligible cost on 1-TC chips).
        if B8 >= 16:
            b_tile = min(b_tile, _round_up(B8 // 2, 8))
        b_tile = max(8, b_tile)

    B_pad = _round_up(B, b_tile)
    n_tiles = B_pad // b_tile

    lengths_i = lengths.astype(jnp.int32)
    if B_pad != B:
        gates_x = jnp.pad(gates_x, ((0, 0), (0, B_pad - B), (0, 0)))
        lengths_p = jnp.pad(lengths_i, (0, B_pad - B))
    else:
        lengths_p = lengths_i
    len2d = lengths_p.reshape(B_pad, 1)
    # Per-tile max sequence length -> data-dependent recurrence bound.
    tile_max = jnp.max(lengths_p.reshape(n_tiles, b_tile), axis=1)

    wfc_row = params["wfc"].reshape(1, H)

    full2d = lambda b, tmax: (0, 0)
    out = pl.pallas_call(
        rnn_recurrence_kernel,
        out_shape=jax.ShapeDtypeStruct((B_pad, 1), jnp.float32),
        grid_spec=pltpu.PrefetchScalarGridSpec(
            num_scalar_prefetch=1,
            grid=(n_tiles,),
            in_specs=[
                pl.BlockSpec((T, b_tile, G), lambda b, tmax: (0, b, 0)),
                pl.BlockSpec((b_tile, 1), lambda b, tmax: (b, 0)),
                pl.BlockSpec((H, G), full2d),
                pl.BlockSpec((H, G), full2d),
                pl.BlockSpec((H, G), full2d),
                pl.BlockSpec((1, G), full2d),
                pl.BlockSpec((1, H), full2d),
                pl.BlockSpec((1, 1), full2d),
            ],
            out_specs=pl.BlockSpec((b_tile, 1), lambda b, tmax: (b, 0)),
        ),
        compiler_params=pltpu.CompilerParams(
            dimension_semantics=("parallel",),
            vmem_limit_bytes=vmem_limit),
    )(tile_max, gates_x, len2d,
      params["whh1"], params["wih2"], params["whh2"], params["b2"],
      wfc_row, params["bfc"])
    return out[:B]


def rnn_reference(matrix, lengths, core_terms, params):
    """Pure-JAX eval-mode reference (PyTorch LSTM semantics)."""
    emb = params["embedding"][core_terms]
    x = jnp.concatenate([matrix.astype(jnp.float32), emb], axis=-1)  # [B,T,I]
    B, T, _ = x.shape
    H = params["whh1"].shape[0]
    hp = lax.Precision.HIGHEST

    def cell(xt, h, c, wih, whh, b):
        g = (jnp.dot(xt, wih, precision=hp)
             + jnp.dot(h, whh, precision=hp) + b)
        i = jax.nn.sigmoid(g[:, 0:H])
        f = jax.nn.sigmoid(g[:, H:2 * H])
        gg = jnp.tanh(g[:, 2 * H:3 * H])
        o = jax.nn.sigmoid(g[:, 3 * H:4 * H])
        c = f * c + i * gg
        return o * jnp.tanh(c), c

    h1 = c1 = h2 = c2 = jnp.zeros((B, H), jnp.float32)
    last = jnp.zeros((B, H), jnp.float32)
    for t in range(T):
        h1, c1 = cell(x[:, t], h1, c1,
                      params["wih1"], params["whh1"], params["b1"])
        h2, c2 = cell(h1, h2, c2,
                      params["wih2"], params["whh2"], params["b2"])
        last = jnp.where((lengths.astype(jnp.int32) - 1)[:, None] == t,
                         h2, last)
    return jnp.dot(last, params["wfc"], precision=hp) + params["bfc"]


def make_params(key, query_max_size, core_term_size, core_term_embedding_size,
                hidden):
    I = query_max_size * 2 + core_term_embedding_size
    H = hidden
    ks = jax.random.split(key, 9)
    s = 0.1
    return {
        "embedding": s * jax.random.normal(
            ks[0], (core_term_size, core_term_embedding_size), jnp.float32),
        # layer 1 (weights stored [in_dim, 4H], PyTorch gate order i,f,g,o)
        "wih1": s * jax.random.normal(ks[1], (I, 4 * H), jnp.float32),
        "whh1": s * jax.random.normal(ks[2], (H, 4 * H), jnp.float32),
        "b1":   s * jax.random.normal(ks[3], (1, 4 * H), jnp.float32),
        # layer 2
        "wih2": s * jax.random.normal(ks[4], (H, 4 * H), jnp.float32),
        "whh2": s * jax.random.normal(ks[5], (H, 4 * H), jnp.float32),
        "b2":   s * jax.random.normal(ks[6], (1, 4 * H), jnp.float32),
        # fc
        "wfc":  s * jax.random.normal(ks[7], (H, 1), jnp.float32),
        "bfc":  s * jax.random.normal(ks[8], (1, 1), jnp.float32),
    }


if __name__ == "__main__":
    key = jax.random.PRNGKey(0)

    B, T = 2, 8
    query_max_size = 8
    core_term_size = 50
    core_term_embedding_size = 16
    hidden = 32                       # lstm_hidden_size (small synthetic)

    kp, km, kc = jax.random.split(key, 3)
    params = make_params(kp, query_max_size, core_term_size,
                         core_term_embedding_size, hidden)

    matrix = jax.random.normal(km, (B, T, 2 * query_max_size), jnp.float32)
    core_terms = jax.random.randint(kc, (B, T), 0, core_term_size,
                                    dtype=jnp.int32)
    lengths = jnp.array([8, 5], dtype=jnp.int32)   # valid sequence lengths

    out = rnn_model_forward(matrix, lengths, core_terms, params)
    jax.block_until_ready(out)
    assert out.shape == (B, 1)

    ref = rnn_reference(matrix, lengths, core_terms, params)
    assert jnp.allclose(out, ref, atol=1e-3, rtol=1e-3), (out, ref)

    print("KERNEL_OK")
</pallas_src>

<mosaic_0001>
module attributes {stable_mosaic.version = 11 : i64} {
  func.func @rnn_recurrence_kernel(%arg0: i32, %arg1: memref<1xi32, #tpu.memory_space<smem>>, %arg2: memref<8x8x128xf32, #tpu.memory_space<vmem>>, %arg3: memref<8x1xi32, #tpu.memory_space<vmem>>, %arg4: memref<32x128xf32, #tpu.memory_space<vmem>>, %arg5: memref<32x128xf32, #tpu.memory_space<vmem>>, %arg6: memref<32x128xf32, #tpu.memory_space<vmem>>, %arg7: memref<1x128xf32, #tpu.memory_space<vmem>>, %arg8: memref<1x32xf32, #tpu.memory_space<vmem>>, %arg9: memref<1x1xf32, #tpu.memory_space<vmem>>, %arg10: memref<8x1xf32, #tpu.memory_space<vmem>>) attributes {dimension_semantics = [#tpu.dimension_semantics<parallel>], iteration_bounds = array<i64: 1>, scalar_prefetch = 1 : i64, scratch_operands = 0 : i64, tpu.core_type = #tpu.core_type<tc>, window_params = [{transform_indices = @transform_0, window_bounds = array<i64: 8, 8, 128>}, {transform_indices = @transform_1, window_bounds = array<i64: 8, 1>}, {pipeline_mode = #tpu.pipeline_mode<synchronous>, transform_indices = @transform_2, window_bounds = array<i64: 32, 128>}, {pipeline_mode = #tpu.pipeline_mode<synchronous>, transform_indices = @transform_3, window_bounds = array<i64: 32, 128>}, {pipeline_mode = #tpu.pipeline_mode<synchronous>, transform_indices = @transform_4, window_bounds = array<i64: 32, 128>}, {pipeline_mode = #tpu.pipeline_mode<synchronous>, transform_indices = @transform_5, window_bounds = array<i64: 1, 128>}, {pipeline_mode = #tpu.pipeline_mode<synchronous>, transform_indices = @transform_6, window_bounds = array<i64: 1, 32>}, {pipeline_mode = #tpu.pipeline_mode<synchronous>, transform_indices = @transform_7, window_bounds = array<i64: 1, 1>}, {transform_indices = @transform_8, window_bounds = array<i64: 8, 1>}]} {
    %c0 = arith.constant 0 : index
    %c0_0 = arith.constant 0 : index
    %0 = vector.load %arg4[%c0, %c0_0] : memref<32x128xf32, #tpu.memory_space<vmem>>, vector<32x128xf32>
    %c0_1 = arith.constant 0 : index
    %c0_2 = arith.constant 0 : index
    %1 = vector.load %arg5[%c0_1, %c0_2] : memref<32x128xf32, #tpu.memory_space<vmem>>, vector<32x128xf32>
    %c0_3 = arith.constant 0 : index
    %c0_4 = arith.constant 0 : index
    %2 = vector.load %arg6[%c0_3, %c0_4] : memref<32x128xf32, #tpu.memory_space<vmem>>, vector<32x128xf32>
    %c0_5 = arith.constant 0 : index
    %c0_6 = arith.constant 0 : index
    %3 = vector.load %arg7[%c0_5, %c0_6] : memref<1x128xf32, #tpu.memory_space<vmem>>, vector<1x128xf32>
    %c0_7 = arith.constant 0 : index
    %c0_8 = arith.constant 0 : index
    %4 = vector.load %arg3[%c0_7, %c0_8] : memref<8x1xi32, #tpu.memory_space<vmem>>, vector<8x1xi32>
    %5 = arith.index_cast %arg0 : i32 to index
    %6 = memref.load %arg1[%5] : memref<1xi32, #tpu.memory_space<smem>>
    %cst = arith.constant 0.000000e+00 : f32
    %7 = vector.broadcast %cst : f32 to vector<8x32xf32>
    %c0_i32 = arith.constant 0 : i32
    %8 = arith.subi %6, %c0_i32 : i32
    %9 = arith.addi %c0_i32, %8 : i32
    %c1_i32 = arith.constant 1 : i32
    %10:5 = scf.for %arg11 = %c0_i32 to %9 step %c1_i32 iter_args(%arg12 = %7, %arg13 = %7, %arg14 = %7, %arg15 = %7, %arg16 = %7) -> (vector<8x32xf32>, vector<8x32xf32>, vector<8x32xf32>, vector<8x32xf32>, vector<8x32xf32>)  : i32 {
      %20 = arith.index_cast %arg11 : i32 to index
      %c0_16 = arith.constant 0 : index
      %c0_17 = arith.constant 0 : index
      %21 = vector.load %arg2[%20, %c0_16, %c0_17] : memref<8x8x128xf32, #tpu.memory_space<vmem>>, vector<1x8x128xf32>
      %22 = vector.shape_cast %21 : vector<1x8x128xf32> to vector<8x128xf32>
      %cst_18 = arith.constant dense<0.000000e+00> : vector<8x128xf32>
      %23 = tpu.matmul %arg12, %0, %cst_18 {dimension_numbers = #tpu.dot_dimension_numbers<[1], [0], [0], [1], [0, 0, 1, 1], [], []>} : vector<8x32xf32>, vector<32x128xf32>, vector<8x128xf32> -> vector<8x128xf32>
      %24 = arith.addf %22, %23 : vector<8x128xf32>
      %25 = arith.negf %24 : vector<8x128xf32>
      %26 = math.exp %25 : vector<8x128xf32>
      %cst_19 = arith.constant 1.000000e+00 : f32
      %27 = vector.broadcast %cst_19 : f32 to vector<8x128xf32>
      %28 = arith.addf %27, %26 : vector<8x128xf32>
      %29 = arith.divf %27, %28 : vector<8x128xf32>
      %30 = math.tanh %24 : vector<8x128xf32>
      %31 = vector.extract_strided_slice %29 {offsets = [0, 0], sizes = [8, 32], strides = [1, 1]} : vector<8x128xf32> to vector<8x32xf32>
      %32 = vector.extract_strided_slice %29 {offsets = [0, 32], sizes = [8, 32], strides = [1, 1]} : vector<8x128xf32> to vector<8x32xf32>
      %33 = vector.extract_strided_slice %29 {offsets = [0, 96], sizes = [8, 32], strides = [1, 1]} : vector<8x128xf32> to vector<8x32xf32>
      %34 = vector.extract_strided_slice %30 {offsets = [0, 64], sizes = [8, 32], strides = [1, 1]} : vector<8x128xf32> to vector<8x32xf32>
      %35 = arith.mulf %32, %arg13 : vector<8x32xf32>
      %36 = arith.mulf %31, %34 : vector<8x32xf32>
      %37 = arith.addf %35, %36 : vector<8x32xf32>
      %38 = math.tanh %37 : vector<8x32xf32>
      %39 = arith.mulf %33, %38 : vector<8x32xf32>
      %cst_20 = arith.constant dense<0.000000e+00> : vector<8x128xf32>
      %40 = tpu.matmul %39, %1, %cst_20 {dimension_numbers = #tpu.dot_dimension_numbers<[1], [0], [0], [1], [0, 0, 1, 1], [], []>} : vector<8x32xf32>, vector<32x128xf32>, vector<8x128xf32> -> vector<8x128xf32>
      %cst_21 = arith.constant dense<0.000000e+00> : vector<8x128xf32>
      %41 = tpu.matmul %arg14, %2, %cst_21 {dimension_numbers = #tpu.dot_dimension_numbers<[1], [0], [0], [1], [0, 0, 1, 1], [], []>} : vector<8x32xf32>, vector<32x128xf32>, vector<8x128xf32> -> vector<8x128xf32>
      %42 = arith.addf %40, %41 : vector<8x128xf32>
      %43 = vector.broadcast %3 : vector<1x128xf32> to vector<8x128xf32>
      %44 = arith.addf %42, %43 : vector<8x128xf32>
      %45 = arith.negf %44 : vector<8x128xf32>
      %46 = math.exp %45 : vector<8x128xf32>
      %cst_22 = arith.constant 1.000000e+00 : f32
      %47 = vector.broadcast %cst_22 : f32 to vector<8x128xf32>
      %48 = arith.addf %47, %46 : vector<8x128xf32>
      %49 = arith.divf %47, %48 : vector<8x128xf32>
      %50 = math.tanh %44 : vector<8x128xf32>
      %51 = vector.extract_strided_slice %49 {offsets = [0, 0], sizes = [8, 32], strides = [1, 1]} : vector<8x128xf32> to vector<8x32xf32>
      %52 = vector.extract_strided_slice %49 {offsets = [0, 32], sizes = [8, 32], strides = [1, 1]} : vector<8x128xf32> to vector<8x32xf32>
      %53 = vector.extract_strided_slice %49 {offsets = [0, 96], sizes = [8, 32], strides = [1, 1]} : vector<8x128xf32> to vector<8x32xf32>
      %54 = vector.extract_strided_slice %50 {offsets = [0, 64], sizes = [8, 32], strides = [1, 1]} : vector<8x128xf32> to vector<8x32xf32>
      %55 = arith.mulf %52, %arg15 : vector<8x32xf32>
      %56 = arith.mulf %51, %54 : vector<8x32xf32>
      %57 = arith.addf %55, %56 : vector<8x32xf32>
      %58 = math.tanh %57 : vector<8x32xf32>
      %59 = arith.mulf %53, %58 : vector<8x32xf32>
      %c1_i32_23 = arith.constant 1 : i32
      %60 = vector.broadcast %c1_i32_23 : i32 to vector<8x1xi32>
      %61 = arith.subi %4, %60 : vector<8x1xi32>
      %62 = vector.broadcast %arg11 : i32 to vector<8x1xi32>
      %63 = arith.cmpi eq, %61, %62 : vector<8x1xi32>
      %64 = vector.shape_cast %63 : vector<8x1xi1> to vector<8x1xi1>
      %65 = vector.broadcast %64 : vector<8x1xi1> to vector<8x32xi1>
      %66 = arith.select %65, %59, %arg16 : vector<8x32xi1>, vector<8x32xf32>
      scf.yield %39, %37, %59, %57, %66 : vector<8x32xf32>, vector<8x32xf32>, vector<8x32xf32>, vector<8x32xf32>, vector<8x32xf32>
    }
    %c0_9 = arith.constant 0 : index
    %c0_10 = arith.constant 0 : index
    %11 = vector.load %arg8[%c0_9, %c0_10] : memref<1x32xf32, #tpu.memory_space<vmem>>, vector<1x32xf32>
    %12 = vector.broadcast %11 : vector<1x32xf32> to vector<8x32xf32>
    %13 = arith.mulf %10#4, %12 : vector<8x32xf32>
    %cst_11 = arith.constant dense<0.000000e+00> : vector<8xf32>
    %14 = vector.multi_reduction <add>, %13, %cst_11 [1] : vector<8x32xf32> to vector<8xf32>
    %15 = vector.shape_cast %14 : vector<8xf32> to vector<8x1xf32>
    %c0_12 = arith.constant 0 : index
    %c0_13 = arith.constant 0 : index
    %16 = vector.load %arg9[%c0_12, %c0_13] : memref<1x1xf32, #tpu.memory_space<vmem>>, vector<1x1xf32>
    %17 = vector.broadcast %16 : vector<1x1xf32> to vector<8x1xf32>
    %18 = arith.addf %15, %17 : vector<8x1xf32>
    %c0_14 = arith.constant 0 : index
    %c0_15 = arith.constant 0 : index
    %19 = vector.load %arg10[%c0_14, %c0_15] : memref<8x1xf32, #tpu.memory_space<vmem>>, vector<8x1xf32>
    tpu.vector_store %arg10[%c0_14, %c0_15], %18 {strides = array<i32>} : memref<8x1xf32, #tpu.memory_space<vmem>>, vector<8x1xf32>,
    return
  }
  func.func @transform_0(%arg0: i32, %arg1: memref<1xi32, #tpu.memory_space<smem>>) -> (i32, i32, i32) {
    %c0_i32 = arith.constant 0 : i32
    %c0_i32_0 = arith.constant 0 : i32
    %c0_i32_1 = arith.constant 0 : i32
    return %c0_i32, %arg0, %c0_i32_0 : i32, i32, i32
  }
  func.func @transform_1(%arg0: i32, %arg1: memref<1xi32, #tpu.memory_space<smem>>) -> (i32, i32) {
    %c0_i32 = arith.constant 0 : i32
    %c0_i32_0 = arith.constant 0 : i32
    return %arg0, %c0_i32 : i32, i32
  }
  func.func @transform_2(%arg0: i32, %arg1: memref<1xi32, #tpu.memory_space<smem>>) -> (i32, i32) {
    %c0_i32 = arith.constant 0 : i32
    %c0_i32_0 = arith.constant 0 : i32
    %c0_i32_1 = arith.constant 0 : i32
    return %c0_i32, %c0_i32_0 : i32, i32
  }
  func.func @transform_3(%arg0: i32, %arg1: memref<1xi32, #tpu.memory_space<smem>>) -> (i32, i32) {
    %c0_i32 = arith.constant 0 : i32
    %c0_i32_0 = arith.constant 0 : i32
    %c0_i32_1 = arith.constant 0 : i32
    return %c0_i32, %c0_i32_0 : i32, i32
  }
  func.func @transform_4(%arg0: i32, %arg1: memref<1xi32, #tpu.memory_space<smem>>) -> (i32, i32) {
    %c0_i32 = arith.constant 0 : i32
    %c0_i32_0 = arith.constant 0 : i32
    %c0_i32_1 = arith.constant 0 : i32
    return %c0_i32, %c0_i32_0 : i32, i32
  }
  func.func @transform_5(%arg0: i32, %arg1: memref<1xi32, #tpu.memory_space<smem>>) -> (i32, i32) {
    %c0_i32 = arith.constant 0 : i32
    %c0_i32_0 = arith.constant 0 : i32
    %c0_i32_1 = arith.constant 0 : i32
    return %c0_i32, %c0_i32_0 : i32, i32
  }
  func.func @transform_6(%arg0: i32, %arg1: memref<1xi32, #tpu.memory_space<smem>>) -> (i32, i32) {
    %c0_i32 = arith.constant 0 : i32
    %c0_i32_0 = arith.constant 0 : i32
    %c0_i32_1 = arith.constant 0 : i32
    return %c0_i32, %c0_i32_0 : i32, i32
  }
  func.func @transform_7(%arg0: i32, %arg1: memref<1xi32, #tpu.memory_space<smem>>) -> (i32, i32) {
    %c0_i32 = arith.constant 0 : i32
    %c0_i32_0 = arith.constant 0 : i32
    %c0_i32_1 = arith.constant 0 : i32
    return %c0_i32, %c0_i32_0 : i32, i32
  }
  func.func @transform_8(%arg0: i32, %arg1: memref<1xi32, #tpu.memory_space<smem>>) -> (i32, i32) {
    %c0_i32 = arith.constant 0 : i32
    %c0_i32_0 = arith.constant 0 : i32
    return %arg0, %c0_i32 : i32, i32
  }
}

</mosaic_0001>

<llo_original>
// kernel: tpu_custom_call.1
$region0: #{tpu_custom_call.1}
  #allocation0 [shape = 'u32[]', space=smem, size = 0x4, offset = 0x4, fixed_abs, tag = 'smem constant byte address 0x4 - core index']
  #allocation1 [shape = 'u32[72,128]{1,0:T(1,128)}', space=vmem, size = 0x9000, scoped, tag = 'internal scratch']
  #allocation2 [shape = 's32[1]{0}', space=sflag, size = 0x4, scoped, tag = 'scoped memory for tpu_custom_call.1']
  #allocation3 [shape = 's32[1]{0:T(128)S(6)}', space=smem, size = 0x200, scoped, tag = 'prefetched SMEM operand 0']
  #allocation4 [shape = 'f32[1,1]{1,0:T(1,128)S(1)}', space=vmem, size = 0x200, scoped, tag = 'scoped memory for tpu_custom_call.1']
  %s0 = inlined_call_operand.<no memory space> [shape: s32[1], index: 0, kind: input, shape index: {}]
  %s1 = inlined_call_operand.hbm [shape: f32[8,8,128], index: 1, kind: input, shape index: {}]
  %s2 = inlined_call_operand.vmem [shape: s32[8,1], index: 2, kind: input, shape index: {}]
  %s3 = inlined_call_operand.hbm [shape: f32[32,128], index: 3, kind: input, shape index: {}]
  %s4 = inlined_call_operand.hbm [shape: f32[32,128], index: 4, kind: input, shape index: {}]
  %s5 = inlined_call_operand.hbm [shape: f32[32,128], index: 5, kind: input, shape index: {}]
  %s6 = inlined_call_operand.vmem [shape: f32[1,128], index: 6, kind: input, shape index: {}]
  %s7 = inlined_call_operand.vmem [shape: f32[1,32], index: 7, kind: input, shape index: {}]
  %s8 = inlined_call_operand.<no memory space> [shape: f32[1,1], index: 8, kind: input, shape index: {}]
  %s9 = inlined_call_operand.vmem [shape: f32[8,1], index: 9, kind: output, shape index: {}]
  %s10 = sld [smem:[#allocation0]]
  $region65: #{tpu_custom_call.1} parent=0
    _
  %s12 = ssub.s32 1, %s10
  %s13 = scalar_select 0, %s12, %s10
  %14 = sst [smem:[#allocation3]] %s0
  %v15 = vstv %s8
  %16 = vst [vmem:[#allocation4] sm:$0x1] %v15
  $region1: #{tpu_custom_call.1} parent=0
    #allocation5 [shape = 'u8[32768]{0}', space=vmem, size = 0x8000, scoped, tag = 'input window, operand 1, single buffered']
    #allocation6 [shape = 's32[1]{0}', space=sflag, size = 0x4, scoped, tag = 'scoped memory for tpu_custom_call.1']
    #allocation7 [shape = 'u8[16384]{0}', space=vmem, size = 0x4000, scoped, tag = 'input window, operand 3, single buffered']
    #allocation8 [shape = 's32[1]{0}', space=sflag, size = 0x4, scoped, tag = 'scoped memory for tpu_custom_call.1']
    #allocation9 [shape = 'u8[16384]{0}', space=vmem, size = 0x4000, scoped, tag = 'input window, operand 4, single buffered']
    #allocation10 [shape = 'u8[16384]{0}', space=vmem, size = 0x4000, scoped, tag = 'input window, operand 5, single buffered']
    #allocation11 [shape = 's32[1]{0}', space=sflag, size = 0x4, scoped, tag = 'scoped memory for tpu_custom_call.1']
    %17 = vsyncpa [#allocation6], 0
    %18 = vsyncpa [#allocation8], 0
    %19 = vsyncpa [#allocation11], 0
    // Predicated region
    $region2: #{tpu_custom_call.1} parent=1 // pred_check
      _
    $region3: #{tpu_custom_call.1} parent=1 // pred_check_branch
      %21 = sbr.rel (0) target = $region5
    $region4: #{tpu_custom_call.1} parent=1 // pred_region
      %23 = vsyncadd [#allocation6], 0
      %s24 = sshll.u32 %s1, 4
      %s25 = int_to_ptr.hbm [resolvable:$true] %s24
      %s26 = sshll.u32 [#allocation5], 4
      %s27 = int_to_ptr.vmem [resolvable:$true] %s26
      %32 = dma.hbm_to_vmem [thread:$0]  %s25, 1024, %s27, [#allocation6], 128, 128, 8
    $region5: #{tpu_custom_call.1} parent=1 // pred_fallthru
      _
    // Predicated region
    $region6: #{tpu_custom_call.1} parent=1 // pred_check
      _
    $region7: #{tpu_custom_call.1} parent=1 // pred_check_branch
      %34 = sbr.rel (0) target = $region9
    $region8: #{tpu_custom_call.1} parent=1 // pred_region
      _
    $region9: #{tpu_custom_call.1} parent=1 // pred_fallthru
      _
    // Predicated region
    $region10: #{tpu_custom_call.1} parent=1 // pred_check
      _
    $region11: #{tpu_custom_call.1} parent=1 // pred_check_branch
      %36 = sbr.rel (0) target = $region13
    $region12: #{tpu_custom_call.1} parent=1 // pred_region
      %38 = vsyncadd [#allocation8], 0
      %s39 = sshll.u32 %s3, 4
      %s40 = int_to_ptr.hbm [resolvable:$true] %s39
      %s41 = sshll.u32 [#allocation7], 4
      %s42 = int_to_ptr.vmem [resolvable:$true] %s41
      %47 = dma.hbm_to_vmem [thread:$0]  %s40, 512, %s42, [#allocation8], 128, 128, 8
    $region13: #{tpu_custom_call.1} parent=1 // pred_fallthru
      _
    // Predicated region
    $region14: #{tpu_custom_call.1} parent=1 // pred_check
      _
    $region15: #{tpu_custom_call.1} parent=1 // pred_check_branch
      %49 = sbr.rel (0) target = $region17
    $region16: #{tpu_custom_call.1} parent=1 // pred_region
      %51 = vsyncadd [#allocation8], 0
      %s52 = sshll.u32 %s4, 4
      %s53 = int_to_ptr.hbm [resolvable:$true] %s52
      %s54 = sshll.u32 [#allocation9], 4
      %s55 = int_to_ptr.vmem [resolvable:$true] %s54
      %60 = dma.hbm_to_vmem [thread:$0]  %s53, 512, %s55, [#allocation8], 128, 128, 8
    $region17: #{tpu_custom_call.1} parent=1 // pred_fallthru
      _
    // Predicated region
    $region18: #{tpu_custom_call.1} parent=1 // pred_check
      _
    $region19: #{tpu_custom_call.1} parent=1 // pred_check_branch
      %62 = sbr.rel (0) target = $region21
    $region20: #{tpu_custom_call.1} parent=1 // pred_region
      %64 = vsyncadd [#allocation11], 0
      %s65 = sshll.u32 %s5, 4
      %s66 = int_to_ptr.hbm [resolvable:$true] %s65
      %s67 = sshll.u32 [#allocation10], 4
      %s68 = int_to_ptr.vmem [resolvable:$true] %s67
      %73 = dma.hbm_to_vmem [thread:$0]  %s66, 512, %s68, [#allocation11], 128, 128, 8
    $region21: #{tpu_custom_call.1} parent=1 // pred_fallthru
      _
    // Predicated region
    $region22: #{tpu_custom_call.1} parent=1 // pred_check
      _
    $region23: #{tpu_custom_call.1} parent=1 // pred_check_branch
      %75 = sbr.rel (0) target = $region25
    $region24: #{tpu_custom_call.1} parent=1 // pred_region
      _
    $region25: #{tpu_custom_call.1} parent=1 // pred_fallthru
      _
    // Predicated region
    $region26: #{tpu_custom_call.1} parent=1 // pred_check
      _
    $region27: #{tpu_custom_call.1} parent=1 // pred_check_branch
      %77 = sbr.rel (0) target = $region29
    $region28: #{tpu_custom_call.1} parent=1 // pred_region
      _
    $region29: #{tpu_custom_call.1} parent=1 // pred_fallthru
      _
    // Predicated region
    $region30: #{tpu_custom_call.1} parent=1 // pred_check
      _
    $region31: #{tpu_custom_call.1} parent=1 // pred_check_branch
      %79 = sbr.rel (0) target = $region33
    $region32: #{tpu_custom_call.1} parent=1 // pred_region
      _
    $region33: #{tpu_custom_call.1} parent=1 // pred_fallthru
      _
    // Predicated region
    $region34: #{tpu_custom_call.1} parent=1 // pred_check
      _
    $region35: #{tpu_custom_call.1} parent=1 // pred_check_branch
      %81 = sbr.rel (0) target = $region37
    $region36: #{tpu_custom_call.1} parent=1 // pred_region
      %83 = dma.done [#allocation6], 1024
    $region37: #{tpu_custom_call.1} parent=1 // pred_fallthru
      _
    // Predicated region
    $region38: #{tpu_custom_call.1} parent=1 // pred_check
      _
    $region39: #{tpu_custom_call.1} parent=1 // pred_check_branch
      %85 = sbr.rel (0) target = $region41
    $region40: #{tpu_custom_call.1} parent=1 // pred_region
      %87 = dma.done [#allocation8], 512
    $region41: #{tpu_custom_call.1} parent=1 // pred_fallthru
      _
    // Predicated region
    $region42: #{tpu_custom_call.1} parent=1 // pred_check
      _
    $region43: #{tpu_custom_call.1} parent=1 // pred_check_branch
      %89 = sbr.rel (0) target = $region45
    $region44: #{tpu_custom_call.1} parent=1 // pred_region
      %91 = dma.done [#allocation8], 512
    $region45: #{tpu_custom_call.1} parent=1 // pred_fallthru
      _
    // Predicated region
    $region46: #{tpu_custom_call.1} parent=1 // pred_check
      _
    $region47: #{tpu_custom_call.1} parent=1 // pred_check_branch
      %93 = sbr.rel (0) target = $region49
    $region48: #{tpu_custom_call.1} parent=1 // pred_region
      %95 = dma.done [#allocation11], 512
    $region49: #{tpu_custom_call.1} parent=1 // pred_fallthru
      _
    %v96 = vld [vmem:[#allocation7] sm:$0xff]
    %v97 = vld [vmem:[#allocation7 + $0x8] sm:$0xff]
    %v98 = vld [vmem:[#allocation7 + $0x10] sm:$0xff]
    %v99 = vld [vmem:[#allocation7 + $0x18] sm:$0xff]
    %v100 = vld [vmem:[#allocation9] sm:$0xff]
    %v101 = vld [vmem:[#allocation9 + $0x8] sm:$0xff]
    %v102 = vld [vmem:[#allocation9 + $0x10] sm:$0xff]
    %v103 = vld [vmem:[#allocation9 + $0x18] sm:$0xff]
    %v104 = vld [vmem:[#allocation10] sm:$0xff]
    %v105 = vld [vmem:[#allocation10 + $0x8] sm:$0xff]
    %v106 = vld [vmem:[#allocation10 + $0x10] sm:$0xff]
    %v107 = vld [vmem:[#allocation10 + $0x18] sm:$0xff]
    %v108 = vld [vmem:[%s6] sm:$0x1]
    %v109 = vld [vmem:[%s2] sm:$0xff]
    %s110 = sld [smem:[#allocation3]]
    // While loop
    $region50: #{tpu_custom_call.1} parent=1 // loop_pre_header
      _
    $region51: #{tpu_custom_call.1} parent=1 // loop_header
      %s112 = sphi 0, %s114
      %p113 = scmp.ge.s32.totalorder %s112, %s110
      %v117 = vphi 0.0, %v188
      %v118 = vphi 0.0, %v182
      %v119 = vphi 0.0, %v279
      %v120 = vphi 0.0, %v273
      %v121 = vphi 0.0, %v288
    $region52: #{tpu_custom_call.1} parent=1 // loop_header_branch
      %116 = sbr.rel (%p113) target = $region56
    $region53: #{tpu_custom_call.1} parent=1 // loop_body
      %s122 = smul.u32 %s112, 8
      %s123 = scalar_lea.vmem [#allocation5], %s122
      %v124 = vld [vmem:[%s123] sm:$0xff]
      %126 = vrot.lane.b32.xlu0 %v117, 32
      %v127 = vpop.permute.xlu0 %126
      %vm128 = vcmask 261120
      %v129 = vsel %vm128, %v127, 0
      %131 = vmatpush.msra.mxu0 0.0
      %132 = vmatpush.msra.mxu0 0.0
      %133 = vmatpush.msra.mxu0 0.0
      %134 = vmatpush.msra.mxu0 0.0
      %135 = vmatpush.msra.mxu0 0.0
      %136 = vmatpush.msra.mxu0 0.0
      %137 = vmatpush.msra.mxu0 0.0
      %138 = vmatpush.msra.mxu0 0.0
      %139 = vmatpush.msra.mxu0 0.0
      %140 = vmatpush.msra.mxu0 0.0
      %141 = vmatpush.msra.mxu0 0.0
      %142 = vmatpush.msra.mxu0 0.0
      %143 = vmatpush.msra.mxu0 %v99
      %144 = vmatpush.msra.mxu0 %v98
      %145 = vmatpush.msra.mxu0 %v97
      %146 = vmatpush.msra.mxu0 %v96
      %147 = vmatmul.f32.gmra.mxu0 %v129
      %v148 = vpop.f32.mrf.mxu0
      %v149 = vadd.f32 0.0, %v148
      %150 = vdwg.mxu0
      %v151 = vadd.f32 %v124, %v149
      %v152 = vxor.u32 %v151, 2147483648
      %v153 = vmul.f32 %v152, 1.442695
      %v154 = vpow.pop %v153
      %v155 = vadd.f32 %v154, 1.0
      %v156 = vrcp.pop %v155
      %v157 = vmul.f32 %v155, %v156
      %v158 = vsub.f32 1.0, %v157
      %v159 = vmul.f32 %v156, %v158
      %v160 = vadd.f32 %v156, %v159
      %vm161 = vweird.f32 %v155
      %vm162 = vweird.f32 %v156
      %vm163 = vmor %vm161, %vm162
      %v164 = vsel %vm163, %v156, %v160
      %v165 = vand.u32 2147483647, %v155
      %vm166 = vcmp.eq.f32.partialorder %v165, 8.507059e+37
      %v167 = vand.u32 %v155, 2147483648
      %v168 = vor.u32 1.1754944e-38, %v167
      %v169 = vsel %vm166, %v168, %v164
      %v170 = vmul.f32 1.0, %v169
      %v171 = vtanh.pop %v151
      %v172 = vmul.f32 %v170, %v118
      %174 = vrot.lane.b32.xlu0 %v171, 64
      %v175 = vpop.permute.xlu0 %174
      %v177 = vmul.f32 %v170, %v175
      %179 = vrot.lane.b32.xlu0 %v177, 32
      %v180 = vpop.permute.xlu0 %179
      %v182 = vadd.f32 %v172, %v180
      %v183 = vtanh.pop %v182
      %185 = vrot.lane.b32.xlu0 %v183, 64
      %v186 = vpop.permute.xlu0 %185
      %v188 = vmul.f32 %v170, %v186
      %190 = vrot.lane.b32.xlu0 %v119, 32
      %v191 = vpop.permute.xlu0 %190
      %v192 = vsel %vm128, %v191, 0
      %194 = vmatpush.msra.mxu0 0.0
      %195 = vmatpush.msra.mxu0 0.0
      %196 = vmatpush.msra.mxu0 0.0
      %197 = vmatpush.msra.mxu0 0.0
      %198 = vmatpush.msra.mxu0 0.0
      %199 = vmatpush.msra.mxu0 0.0
      %200 = vmatpush.msra.mxu0 0.0
      %201 = vmatpush.msra.mxu0 0.0
      %202 = vmatpush.msra.mxu0 0.0
      %203 = vmatpush.msra.mxu0 0.0
      %204 = vmatpush.msra.mxu0 0.0
      %205 = vmatpush.msra.mxu0 0.0
      %206 = vmatpush.msra.mxu0 %v107
      %207 = vmatpush.msra.mxu0 %v106
      %208 = vmatpush.msra.mxu0 %v105
      %209 = vmatpush.msra.mxu0 %v104
      %210 = vmatmul.f32.gmra.mxu0 %v192
      %v211 = vpop.f32.mrf.mxu0
      %v212 = vadd.f32 0.0, %v211
      %213 = vdwg.mxu0
      %215 = vrot.lane.b32.xlu0 %v188, 32
      %v216 = vpop.permute.xlu0 %215
      %v217 = vsel %vm128, %v216, 0
      %219 = vmatpush.msra.mxu0 0.0
      %220 = vmatpush.msra.mxu0 0.0
      %221 = vmatpush.msra.mxu0 0.0
      %222 = vmatpush.msra.mxu0 0.0
      %223 = vmatpush.msra.mxu0 0.0
      %224 = vmatpush.msra.mxu0 0.0
      %225 = vmatpush.msra.mxu0 0.0
      %226 = vmatpush.msra.mxu0 0.0
      %227 = vmatpush.msra.mxu0 0.0
      %228 = vmatpush.msra.mxu0 0.0
      %229 = vmatpush.msra.mxu0 0.0
      %230 = vmatpush.msra.mxu0 0.0
      %231 = vmatpush.msra.mxu0 %v103
      %232 = vmatpush.msra.mxu0 %v102
      %233 = vmatpush.msra.mxu0 %v101
      %234 = vmatpush.msra.mxu0 %v100
      %235 = vmatmul.f32.gmra.mxu0 %v217
      %v236 = vpop.f32.mrf.mxu0
      %v237 = vadd.f32 %v212, %v236
      %238 = vdwg.mxu0
      %v240 = vperm.slane %v108, 0
      %v242 = vadd.f32 %v237, %v240
      %v243 = vxor.u32 %v242, 2147483648
      %v244 = vmul.f32 %v243, 1.442695
      %v245 = vpow.pop %v244
      %v246 = vadd.f32 %v245, 1.0
      %v247 = vrcp.pop %v246
      %v248 = vmul.f32 %v246, %v247
      %v249 = vsub.f32 1.0, %v248
      %v250 = vmul.f32 %v247, %v249
      %v251 = vadd.f32 %v247, %v250
      %vm252 = vweird.f32 %v246
      %vm253 = vweird.f32 %v247
      %vm254 = vmor %vm252, %vm253
      %v255 = vsel %vm254, %v247, %v251
      %v256 = vand.u32 2147483647, %v246
      %vm257 = vcmp.eq.f32.partialorder %v256, 8.507059e+37
      %v258 = vand.u32 %v246, 2147483648
      %v259 = vor.u32 1.1754944e-38, %v258
      %v260 = vsel %vm257, %v259, %v255
      %v261 = vmul.f32 1.0, %v260
      %v262 = vtanh.pop %v242
      %v263 = vmul.f32 %v261, %v120
      %265 = vrot.lane.b32.xlu0 %v262, 64
      %v266 = vpop.permute.xlu0 %265
      %v268 = vmul.f32 %v261, %v266
      %270 = vrot.lane.b32.xlu0 %v268, 32
      %v271 = vpop.permute.xlu0 %270
      %v273 = vadd.f32 %v263, %v271
      %v274 = vtanh.pop %v273
      %276 = vrot.lane.b32.xlu0 %v274, 64
      %v277 = vpop.permute.xlu0 %276
      %v279 = vmul.f32 %v261, %v277
      %v280 = vsub.s32 %v109, 1
      %v281 = vstv %s112
      %vm282 = vcmp.eq.s32.totalorder %v280, %v281
      %v283 = vsel %vm282, 1, 0
      %284 = vset.pattern.permute.xlu0 0
      %285 = vperm.xlu0 %284, %v283
      %v286 = vpop.permute.xlu0 %285
      %vm287 = vcmp.eq.s32.totalorder %v286, 1
      %v288 = vsel %vm287, %v279, %v121
    $region54: #{tpu_custom_call.1} parent=1 // loop_footer
      %s114 = sadd.s32 %s112, 1
    $region55: #{tpu_custom_call.1} parent=1 // loop_footer_branch
      %111 = sbr.rel target = $region51
    $region56: #{tpu_custom_call.1} parent=1 // loop_exit
      _
    %v289 = vld [vmem:[%s7] sm:$0x1]
    %v291 = vperm.slane %v289, 0
    %292 = vrot.lane.b32.xlu0 %v291, 96
    %v293 = vpop.permute.xlu0 %292
    %v295 = vmul.f32 %v121, %v293
    %297 = vrot.lane.b32.xlu0 %v295, 32
    %v298 = vpop.permute.xlu0 %297
    %vm300 = vcmask 261120
    %v301 = vsel %vm300, %v298, 0.0
    %302 = vadd.xlane.f32.xlu0 %v301
    %v303 = vpop.xlane.xlu0 %302
    %v304 = vld [vmem:[#allocation4] sm:$0x1]
    %v306 = vperm.slane %v304, 0
    %v308 = vadd.f32 %v303, %v306
    %vm309 = vcmask 7168
    %310 = vst.msk [vmem:[%s9] sm:$0xff] %vm309, %v308
    // Predicated region
    $region57: #{tpu_custom_call.1} parent=1 // pred_check
      _
    $region58: #{tpu_custom_call.1} parent=1 // pred_check_branch
      %312 = sbr.rel (0) target = $region60
    $region59: #{tpu_custom_call.1} parent=1 // pred_region
      _
    $region60: #{tpu_custom_call.1} parent=1 // pred_fallthru
      _
    // Predicated region
    $region61: #{tpu_custom_call.1} parent=1 // pred_check
      _
    $region62: #{tpu_custom_call.1} parent=1 // pred_check_branch
      %314 = sbr.rel (0) target = $region64
    $region63: #{tpu_custom_call.1} parent=1 // pred_region
      _
    $region64: #{tpu_custom_call.1} parent=1 // pred_fallthru
      _
    %315 = vsyncpa [#allocation6], 1
    %316 = vsyncpa [#allocation8], 1
    %317 = vsyncpa [#allocation11], 1

</llo_original>
